<compile_context>
chip_gen: v6e
topology: v6e:2x2x1
jax: 0.10.0
libtpu: 0.0.40
codegen_flags: <defaults>
</compile_context>

<pallas_src>
import functools

import jax
import jax.numpy as jnp
from jax.experimental import pallas as pl
from jax.experimental.pallas import tpu as pltpu

HIDDEN_PAD = 128   # lane-dense width for all hidden / logit dims
MAX_TB = 4096      # batch-tile cap (keeps intermediates comfortably inside scoped VMEM)


def mlp_kernel(x_ref, w1_ref, wstack_ref, b_ref, o_ref):
    # bf16 inputs to the MXU, f32 accumulation, f32 elementwise.
    x = x_ref[...].astype(jnp.bfloat16)
    b = b_ref[...]                                   # (8, 128) f32, rows 0..3 used

    h = jnp.dot(x, w1_ref[...], preferred_element_type=jnp.float32) + b[0:1, :]
    h = jnp.maximum(h, 0.0).astype(jnp.bfloat16)

    h = jnp.dot(h, wstack_ref[0], preferred_element_type=jnp.float32) + b[1:2, :]
    h = jnp.maximum(h, 0.0).astype(jnp.bfloat16)

    h = jnp.dot(h, wstack_ref[1], preferred_element_type=jnp.float32) + b[2:3, :]
    h = jnp.maximum(h, 0.0).astype(jnp.bfloat16)

    logits = jnp.dot(h, wstack_ref[2], preferred_element_type=jnp.float32) + b[3:4, :]
    # Padded class lanes carry a -1e30 bias -> exp underflows to exactly 0, so the
    # 128-lane softmax equals the softmax over the true num_classes lanes.
    m = jnp.max(logits, axis=-1, keepdims=True)
    e = jnp.exp(logits - m)
    denom = jnp.sum(e, axis=-1, keepdims=True)
    probs = e * pl.reciprocal(denom, approx=False)
    nc = o_ref.shape[-1]                             # static Python int
    o_ref[...] = probs[:, :nc].astype(o_ref.dtype)   # true-width (tb, num_classes) store


def _pad_to(a, shape):
    return jnp.pad(a, [(0, t - s) for s, t in zip(a.shape, shape)])


def prepare_params(params, num_classes, hidden_pad=HIDDEN_PAD):
    """One-time layout prep (NOT per forward call). Returns ONLY arrays:
       w1:     (input_size, 128) bf16
       wstack: (3, 128, 128)     bf16   (w2, w3, w4, transposed to (in, out))
       biases: (8, 128)          f32    (rows 0..3 = b1..b4; b4 pad lanes = -1e30)"""
    H = hidden_pad
    input_size = params["w1"].shape[1]

    w1 = _pad_to(params["w1"].T, (input_size, H)).astype(jnp.bfloat16)

    ws = []
    for k in (2, 3, 4):
        w = params[f"w{k}"].T                        # (in, out)
        ws.append(_pad_to(w, (H, H)).astype(jnp.bfloat16))
    wstack = jnp.stack(ws, axis=0)                   # (3, 128, 128)

    bs = []
    for k in (1, 2, 3, 4):
        b = _pad_to(params[f"b{k}"].reshape(1, -1), (1, H)).astype(jnp.float32)
        if k == 4:
            lane = jnp.arange(H)[None, :]
            b = jnp.where(lane < num_classes, b, jnp.float32(-1e30))
        bs.append(b)
    biases = _pad_to(jnp.concatenate(bs, axis=0), (8, H))   # (8, 128), one f32 vreg

    return {"w1": w1, "wstack": wstack, "biases": biases}


def _default_tb(B):
    """Largest multiple-of-8 tile <= MAX_TB that still gives >= 2 grid steps
       (v7x megacore); tiny batches fall back to a single full-batch tile."""
    if B <= 8:
        return B
    half = pl.cdiv(B, 2)
    tb = min(MAX_TB, ((half + 7) // 8) * 8)
    return min(tb, B)


@functools.partial(jax.jit, static_argnames=("num_classes", "tb"))
def neural_net_forward(x, prepared, num_classes, *, tb=None):
    B, F = x.shape
    H = HIDDEN_PAD

    if tb is None:
        tb = _default_tb(B)
    nb = pl.cdiv(B, tb)

    full = lambda i: (0, 0)                   # weights/biases: VMEM-resident across grid
    full3 = lambda i: (0, 0, 0)
    tiled = lambda i: (i, 0)                  # x / out: one batch tile per grid step

    in_specs = [
        pl.BlockSpec((tb, F), tiled),
        pl.BlockSpec(prepared["w1"].shape, full),
        pl.BlockSpec(prepared["wstack"].shape, full3),
        pl.BlockSpec(prepared["biases"].shape, full),
    ]
    # Block last dim == full array dim (num_classes) -> legal, true-width output,
    # no post-kernel slice.
    out_spec = pl.BlockSpec((tb, num_classes), tiled)

    weight_bytes = (prepared["w1"].size + prepared["wstack"].size) * 2
    bias_bytes = prepared["biases"].size * 4
    cost = pl.CostEstimate(
        flops=2 * B * H * (F + 3 * H),
        transcendentals=B * H,
        bytes_accessed=B * F * 4 + weight_bytes + bias_bytes + B * num_classes * 4,
    )

    return pl.pallas_call(
        mlp_kernel,
        out_shape=jax.ShapeDtypeStruct((B, num_classes), jnp.float32),
        grid_spec=pltpu.PrefetchScalarGridSpec(
            num_scalar_prefetch=0,
            grid=(nb,),
            in_specs=in_specs,
            out_specs=out_spec,
        ),
        compiler_params=pltpu.CompilerParams(
            dimension_semantics=("parallel",),        # megacore-shardable batch axis (v7x)
            vmem_limit_bytes=32 * 1024 * 1024,
        ),
        cost_estimate=cost,
    )(x, prepared["w1"], prepared["wstack"], prepared["biases"])


def init_params(key, input_size, num_classes):
    """Deterministic PyTorch-Linear-style init: U(-1/sqrt(fan_in), 1/sqrt(fan_in))."""
    sizes = [(40, input_size), (60, 40), (60, 60), (num_classes, 60)]
    params = {}
    for i, (fan_out, fan_in) in enumerate(sizes, start=1):
        key, kw, kb = jax.random.split(key, 3)
        bound = 1.0 / jnp.sqrt(fan_in)
        params[f"w{i}"] = jax.random.uniform(
            kw, (fan_out, fan_in), jnp.float32, -bound, bound)
        params[f"b{i}"] = jax.random.uniform(
            kb, (fan_out,), jnp.float32, -bound, bound)
    return params


def reference_forward(x, params):
    h = x
    for k in (1, 2, 3):
        h = jnp.maximum(h @ params[f"w{k}"].T + params[f"b{k}"], 0.0)
    logits = h @ params["w4"].T + params["b4"]
    return jax.nn.softmax(logits, axis=1)


if __name__ == "__main__":
    batch = 16            # small demo batch; auto tb=8 -> 2-step "parallel" grid
    input_size = 32       # X_train.shape[1] stand-in
    num_classes = 6       # len(set(labels)) stand-in

    key = jax.random.PRNGKey(0)
    key, kx = jax.random.split(key)
    x = jax.random.normal(kx, (batch, input_size), jnp.float32)

    params = init_params(key, input_size, num_classes)
    prepared = prepare_params(params, num_classes)   # one-time layout/dtype prep

    out = neural_net_forward(x, prepared, num_classes)
    out = jax.block_until_ready(out)

    ref = reference_forward(x, params)
    assert out.shape == (batch, num_classes)
    # bf16 MXU inputs -> tolerance loosened vs pure-f32 reference.
    assert jnp.allclose(out, ref, atol=2e-2, rtol=2e-2)
    assert jnp.allclose(jnp.sum(out, axis=1), 1.0, atol=1e-4)

    print("KERNEL_OK")
</pallas_src>

<mosaic_0001>
module attributes {stable_mosaic.version = 11 : i64} {
  func.func @mlp_kernel(%arg0: i32, %arg1: memref<8x32xf32, #tpu.memory_space<vmem>>, %arg2: memref<32x128xbf16, #tpu.memory_space<vmem>>, %arg3: memref<3x128x128xbf16, #tpu.memory_space<vmem>>, %arg4: memref<8x128xf32, #tpu.memory_space<vmem>>, %arg5: memref<8x6xf32, #tpu.memory_space<vmem>>) attributes {dimension_semantics = [#tpu.dimension_semantics<parallel>], iteration_bounds = array<i64: 2>, scalar_prefetch = 0 : i64, scratch_operands = 0 : i64, tpu.core_type = #tpu.core_type<tc>, window_params = [{transform_indices = @transform_0, window_bounds = array<i64: 8, 32>}, {pipeline_mode = #tpu.pipeline_mode<synchronous>, transform_indices = @transform_1, window_bounds = array<i64: 32, 128>}, {pipeline_mode = #tpu.pipeline_mode<synchronous>, transform_indices = @transform_2, window_bounds = array<i64: 3, 128, 128>}, {pipeline_mode = #tpu.pipeline_mode<synchronous>, transform_indices = @transform_3, window_bounds = array<i64: 8, 128>}, {transform_indices = @transform_4, window_bounds = array<i64: 8, 6>}]} {
    %c0 = arith.constant 0 : index
    %c0_0 = arith.constant 0 : index
    %0 = vector.load %arg1[%c0, %c0_0] : memref<8x32xf32, #tpu.memory_space<vmem>>, vector<8x32xf32>
    %1 = arith.truncf %0 : vector<8x32xf32> to vector<8x32xbf16>
    %c0_1 = arith.constant 0 : index
    %c0_2 = arith.constant 0 : index
    %2 = vector.load %arg4[%c0_1, %c0_2] : memref<8x128xf32, #tpu.memory_space<vmem>>, vector<8x128xf32>
    %c0_3 = arith.constant 0 : index
    %c0_4 = arith.constant 0 : index
    %3 = vector.load %arg2[%c0_3, %c0_4] : memref<32x128xbf16, #tpu.memory_space<vmem>>, vector<32x128xbf16>
    %cst = arith.constant dense<0.000000e+00> : vector<8x128xf32>
    %4 = tpu.matmul %1, %3, %cst {dimension_numbers = #tpu.dot_dimension_numbers<[1], [0], [0], [1], [0, 0, 1, 1], [], []>} : vector<8x32xbf16>, vector<32x128xbf16>, vector<8x128xf32> -> vector<8x128xf32>
    %5 = vector.extract_strided_slice %2 {offsets = [0, 0], sizes = [1, 128], strides = [1, 1]} : vector<8x128xf32> to vector<1x128xf32>
    %6 = vector.broadcast %5 : vector<1x128xf32> to vector<8x128xf32>
    %7 = arith.addf %4, %6 : vector<8x128xf32>
    %cst_5 = arith.constant 0.000000e+00 : f32
    %8 = vector.broadcast %cst_5 : f32 to vector<8x128xf32>
    %9 = arith.maximumf %7, %8 : vector<8x128xf32>
    %10 = arith.truncf %9 : vector<8x128xf32> to vector<8x128xbf16>
    %c0_6 = arith.constant 0 : index
    %c0_7 = arith.constant 0 : index
    %c0_8 = arith.constant 0 : index
    %11 = vector.load %arg3[%c0_6, %c0_7, %c0_8] : memref<3x128x128xbf16, #tpu.memory_space<vmem>>, vector<1x128x128xbf16>
    %12 = vector.shape_cast %11 : vector<1x128x128xbf16> to vector<128x128xbf16>
    %cst_9 = arith.constant dense<0.000000e+00> : vector<8x128xf32>
    %13 = tpu.matmul %10, %12, %cst_9 {dimension_numbers = #tpu.dot_dimension_numbers<[1], [0], [0], [1], [0, 0, 1, 1], [], []>} : vector<8x128xbf16>, vector<128x128xbf16>, vector<8x128xf32> -> vector<8x128xf32>
    %14 = vector.extract_strided_slice %2 {offsets = [1, 0], sizes = [1, 128], strides = [1, 1]} : vector<8x128xf32> to vector<1x128xf32>
    %15 = vector.broadcast %14 : vector<1x128xf32> to vector<8x128xf32>
    %16 = arith.addf %13, %15 : vector<8x128xf32>
    %cst_10 = arith.constant 0.000000e+00 : f32
    %17 = vector.broadcast %cst_10 : f32 to vector<8x128xf32>
    %18 = arith.maximumf %16, %17 : vector<8x128xf32>
    %19 = arith.truncf %18 : vector<8x128xf32> to vector<8x128xbf16>
    %c1 = arith.constant 1 : index
    %c0_11 = arith.constant 0 : index
    %c0_12 = arith.constant 0 : index
    %20 = vector.load %arg3[%c1, %c0_11, %c0_12] : memref<3x128x128xbf16, #tpu.memory_space<vmem>>, vector<1x128x128xbf16>
    %21 = vector.shape_cast %20 : vector<1x128x128xbf16> to vector<128x128xbf16>
    %cst_13 = arith.constant dense<0.000000e+00> : vector<8x128xf32>
    %22 = tpu.matmul %19, %21, %cst_13 {dimension_numbers = #tpu.dot_dimension_numbers<[1], [0], [0], [1], [0, 0, 1, 1], [], []>} : vector<8x128xbf16>, vector<128x128xbf16>, vector<8x128xf32> -> vector<8x128xf32>
    %23 = vector.extract_strided_slice %2 {offsets = [2, 0], sizes = [1, 128], strides = [1, 1]} : vector<8x128xf32> to vector<1x128xf32>
    %24 = vector.broadcast %23 : vector<1x128xf32> to vector<8x128xf32>
    %25 = arith.addf %22, %24 : vector<8x128xf32>
    %cst_14 = arith.constant 0.000000e+00 : f32
    %26 = vector.broadcast %cst_14 : f32 to vector<8x128xf32>
    %27 = arith.maximumf %25, %26 : vector<8x128xf32>
    %28 = arith.truncf %27 : vector<8x128xf32> to vector<8x128xbf16>
    %c2 = arith.constant 2 : index
    %c0_15 = arith.constant 0 : index
    %c0_16 = arith.constant 0 : index
    %29 = vector.load %arg3[%c2, %c0_15, %c0_16] : memref<3x128x128xbf16, #tpu.memory_space<vmem>>, vector<1x128x128xbf16>
    %30 = vector.shape_cast %29 : vector<1x128x128xbf16> to vector<128x128xbf16>
    %cst_17 = arith.constant dense<0.000000e+00> : vector<8x128xf32>
    %31 = tpu.matmul %28, %30, %cst_17 {dimension_numbers = #tpu.dot_dimension_numbers<[1], [0], [0], [1], [0, 0, 1, 1], [], []>} : vector<8x128xbf16>, vector<128x128xbf16>, vector<8x128xf32> -> vector<8x128xf32>
    %32 = vector.extract_strided_slice %2 {offsets = [3, 0], sizes = [1, 128], strides = [1, 1]} : vector<8x128xf32> to vector<1x128xf32>
    %33 = vector.broadcast %32 : vector<1x128xf32> to vector<8x128xf32>
    %34 = arith.addf %31, %33 : vector<8x128xf32>
    %cst_18 = arith.constant dense<0xFF800000> : vector<8xf32>
    %35 = vector.multi_reduction <maximumf>, %34, %cst_18 [1] : vector<8x128xf32> to vector<8xf32>
    %36 = vector.shape_cast %35 : vector<8xf32> to vector<8x1xf32>
    %37 = vector.broadcast %36 : vector<8x1xf32> to vector<8x128xf32>
    %38 = arith.subf %34, %37 : vector<8x128xf32>
    %39 = math.exp %38 : vector<8x128xf32>
    %cst_19 = arith.constant dense<0.000000e+00> : vector<8xf32>
    %40 = vector.multi_reduction <add>, %39, %cst_19 [1] : vector<8x128xf32> to vector<8xf32>
    %41 = vector.shape_cast %40 : vector<8xf32> to vector<8x1xf32>
    %42 = tpu.reciprocal %41 : vector<8x1xf32> -> vector<8x1xf32>
    %43 = vector.broadcast %42 : vector<8x1xf32> to vector<8x128xf32>
    %44 = arith.mulf %39, %43 : vector<8x128xf32>
    %45 = vector.extract_strided_slice %44 {offsets = [0, 0], sizes = [8, 6], strides = [1, 1]} : vector<8x128xf32> to vector<8x6xf32>
    %c0_20 = arith.constant 0 : index
    %c0_21 = arith.constant 0 : index
    %46 = vector.load %arg5[%c0_20, %c0_21] : memref<8x6xf32, #tpu.memory_space<vmem>>, vector<8x6xf32>
    tpu.vector_store %arg5[%c0_20, %c0_21], %45 {strides = array<i32>} : memref<8x6xf32, #tpu.memory_space<vmem>>, vector<8x6xf32>,
    return
  }
  func.func @transform_0(%arg0: i32) -> (i32, i32) {
    %c0_i32 = arith.constant 0 : i32
    %c0_i32_0 = arith.constant 0 : i32
    return %arg0, %c0_i32 : i32, i32
  }
  func.func @transform_1(%arg0: i32) -> (i32, i32) {
    %c0_i32 = arith.constant 0 : i32
    %c0_i32_0 = arith.constant 0 : i32
    %c0_i32_1 = arith.constant 0 : i32
    return %c0_i32, %c0_i32_0 : i32, i32
  }
  func.func @transform_2(%arg0: i32) -> (i32, i32, i32) {
    %c0_i32 = arith.constant 0 : i32
    %c0_i32_0 = arith.constant 0 : i32
    %c0_i32_1 = arith.constant 0 : i32
    %c0_i32_2 = arith.constant 0 : i32
    return %c0_i32, %c0_i32_0, %c0_i32_1 : i32, i32, i32
  }
  func.func @transform_3(%arg0: i32) -> (i32, i32) {
    %c0_i32 = arith.constant 0 : i32
    %c0_i32_0 = arith.constant 0 : i32
    %c0_i32_1 = arith.constant 0 : i32
    return %c0_i32, %c0_i32_0 : i32, i32
  }
  func.func @transform_4(%arg0: i32) -> (i32, i32) {
    %c0_i32 = arith.constant 0 : i32
    %c0_i32_0 = arith.constant 0 : i32
    return %arg0, %c0_i32 : i32, i32
  }
}

</mosaic_0001>

<llo_original>
// kernel: neural_net_forward.1
$region0: #{neural_net_forward.1}
  #allocation0 [shape = 'u32[]', space=smem, size = 0x4, offset = 0x4, fixed_abs, tag = 'smem constant byte address 0x4 - core index']
  #allocation1 [shape = 'u32[144,128]{1,0:T(1,128)}', space=vmem, size = 0x12000, scoped, tag = 'internal scratch']
  %s0 = inlined_call_operand.hbm [shape: f32[16,32], index: 0, kind: input, shape index: {}]
  %s1 = inlined_call_operand.hbm [shape: bf16[32,128], index: 1, kind: input, shape index: {}]
  %s2 = inlined_call_operand.hbm [shape: bf16[3,128,128], index: 2, kind: input, shape index: {}]
  %s3 = inlined_call_operand.hbm [shape: f32[8,128], index: 3, kind: input, shape index: {}]
  %s4 = inlined_call_operand.vmem [shape: f32[16,6], index: 4, kind: output, shape index: {}]
  %s5 = sld [smem:[#allocation0]]
  $region65: #{neural_net_forward.1} parent=0
    _
  %s7 = ssub.s32 1, %s5
  %s8 = scalar_select 0, %s7, %s5
  $region1: #{neural_net_forward.1} parent=0
    #allocation2 [shape = 'u8[8192]{0}', space=vmem, size = 0x2000, scoped, tag = 'input window, operand 0']
    #allocation3 [shape = 's32[2]{0}', space=sflag, size = 0x8, scoped, tag = 'scoped memory for neural_net_forward.1']
    #allocation4 [shape = 'u8[8192]{0}', space=vmem, size = 0x2000, scoped, tag = 'input window, operand 1, single buffered']
    #allocation5 [shape = 's32[1]{0}', space=sflag, size = 0x4, scoped, tag = 'scoped memory for neural_net_forward.1']
    #allocation6 [shape = 'u8[98304]{0}', space=vmem, size = 0x18000, scoped, tag = 'input window, operand 2, single buffered']
    #allocation7 [shape = 'u8[4096]{0}', space=vmem, size = 0x1000, scoped, tag = 'input window, operand 3, single buffered']
    #allocation8 [shape = 's32[1]{0}', space=sflag, size = 0x4, scoped, tag = 'scoped memory for neural_net_forward.1']
    %9 = vsyncpa [#allocation3], 0
    %s10 = scalar_lea.sflag [#allocation3], 1
    %11 = vsyncpa %s10, 0
    %12 = vsyncpa [#allocation5], 0
    %13 = vsyncpa [#allocation8], 0
    loop: start=0, step=1, limit=4
    $region2: #{neural_net_forward.1} parent=1 // loop_pre_header
      _
    $region3: #{neural_net_forward.1} parent=1 // loop_header
      %s15 = sphi 0, %s19
      %p16 = scmp.ge.s32.totalorder %s15, 4
      %s25 = sphi 0, %s27
      %s28 = sphi 0, %s25
      %s29 = sphi 0, %s28
      %s45 = sphi 0, %s29
      %s49 = sphi 0, %s49
      %s51 = sphi 0, %s49
      %s52 = sphi 0, %s51
      %s66 = sphi 0, %s52
      %s70 = sphi 0, %s70
      %s72 = sphi 0, %s70
      %s73 = sphi 0, %s72
      %s87 = sphi 0, %s73
      %s91 = sphi 0, %s91
      %s93 = sphi 0, %s91
      %s94 = sphi 0, %s93
      %s108 = sphi 0, %s94
      %s114 = sphi 0, %s116
      %s117 = sphi 0, %s114
      %s118 = sphi 0, %s117
      %s134 = sphi 0, %s118
    $region4: #{neural_net_forward.1} parent=1 // loop_header_branch
      %18 = sbr.rel (%p16) target = $region8
    $region5: #{neural_net_forward.1} parent=1 // loop_body
      %s20 = ssub.s32 %s15, 1
      %s21 = ssub.s32 %s15, 2
      %s22 = sadd.s32 %s15, 1
      %s23 = ssub.s32 %s15, %s22
      %p24 = scmp.eq.s32.totalorder %s23, 0
      %s26 = sadd.s32 %s25, 1
      %s27 = scalar_select %p24, %s25, %s26
      %p30 = pneg %p24
      %p31 = scmp.eq.s32.totalorder %s15, 1
      %p32 = por %p30, %p31
      %p33 = scmp.ne.s32.totalorder %s25, %s28
      %p34 = scmp.eq.s32.totalorder %s15, 0
      %p35 = por %p33, %p34
      %p36 = scmp.ne.s32.totalorder %s25, %s28
      %p37 = scmp.eq.s32.totalorder %s20, 1
      %p38 = por %p36, %p37
      %p39 = scmp.ne.s32.totalorder %s28, %s29
      %p40 = scmp.eq.s32.totalorder %s20, 0
      %p41 = por %p39, %p40
      %p42 = scmp.ne.s32.totalorder %s28, %s29
      %p43 = scmp.eq.s32.totalorder %s21, 1
      %p44 = por %p42, %p43
      %p46 = scmp.ne.s32.totalorder %s29, %s45
      %p47 = scmp.eq.s32.totalorder %s21, 0
      %p48 = por %p46, %p47
      %s50 = sadd.s32 %s49, 1
      %p53 = scmp.eq.s32.totalorder %s15, 1
      %p54 = scmp.ne.s32.totalorder %s49, %s51
      %p55 = scmp.eq.s32.totalorder %s15, 0
      %p56 = por %p54, %p55
      %p57 = scmp.ne.s32.totalorder %s49, %s51
      %p58 = scmp.eq.s32.totalorder %s20, 1
      %p59 = por %p57, %p58
      %p60 = scmp.ne.s32.totalorder %s51, %s52
      %p61 = scmp.eq.s32.totalorder %s20, 0
      %p62 = por %p60, %p61
      %p63 = scmp.ne.s32.totalorder %s51, %s52
      %p64 = scmp.eq.s32.totalorder %s21, 1
      %p65 = por %p63, %p64
      %p67 = scmp.ne.s32.totalorder %s52, %s66
      %p68 = scmp.eq.s32.totalorder %s21, 0
      %p69 = por %p67, %p68
      %s71 = sadd.s32 %s70, 1
      %p74 = scmp.eq.s32.totalorder %s15, 1
      %p75 = scmp.ne.s32.totalorder %s70, %s72
      %p76 = scmp.eq.s32.totalorder %s15, 0
      %p77 = por %p75, %p76
      %p78 = scmp.ne.s32.totalorder %s70, %s72
      %p79 = scmp.eq.s32.totalorder %s20, 1
      %p80 = por %p78, %p79
      %p81 = scmp.ne.s32.totalorder %s72, %s73
      %p82 = scmp.eq.s32.totalorder %s20, 0
      %p83 = por %p81, %p82
      %p84 = scmp.ne.s32.totalorder %s72, %s73
      %p85 = scmp.eq.s32.totalorder %s21, 1
      %p86 = por %p84, %p85
      %p88 = scmp.ne.s32.totalorder %s73, %s87
      %p89 = scmp.eq.s32.totalorder %s21, 0
      %p90 = por %p88, %p89
      %s92 = sadd.s32 %s91, 1
      %p95 = scmp.eq.s32.totalorder %s15, 1
      %p96 = scmp.ne.s32.totalorder %s91, %s93
      %p97 = scmp.eq.s32.totalorder %s15, 0
      %p98 = por %p96, %p97
      %p99 = scmp.ne.s32.totalorder %s91, %s93
      %p100 = scmp.eq.s32.totalorder %s20, 1
      %p101 = por %p99, %p100
      %p102 = scmp.ne.s32.totalorder %s93, %s94
      %p103 = scmp.eq.s32.totalorder %s20, 0
      %p104 = por %p102, %p103
      %p105 = scmp.ne.s32.totalorder %s93, %s94
      %p106 = scmp.eq.s32.totalorder %s21, 1
      %p107 = por %p105, %p106
      %p109 = scmp.ne.s32.totalorder %s94, %s108
      %p110 = scmp.eq.s32.totalorder %s21, 0
      %p111 = por %p109, %p110
      %s112 = ssub.s32 %s15, %s22
      %p113 = scmp.eq.s32.totalorder %s112, 0
      %s115 = sadd.s32 %s114, 1
      %s116 = scalar_select %p113, %s114, %s115
      %p119 = pneg %p113
      %p120 = scmp.eq.s32.totalorder %s15, 1
      %p121 = por %p119, %p120
      %p122 = scmp.ne.s32.totalorder %s114, %s117
      %p123 = scmp.eq.s32.totalorder %s15, 0
      %p124 = por %p122, %p123
      %p125 = scmp.ne.s32.totalorder %s114, %s117
      %p126 = scmp.eq.s32.totalorder %s20, 1
      %p127 = por %p125, %p126
      %p128 = scmp.ne.s32.totalorder %s117, %s118
      %p129 = scmp.eq.s32.totalorder %s20, 0
      %p130 = por %p128, %p129
      %p131 = scmp.ne.s32.totalorder %s117, %s118
      %p132 = scmp.eq.s32.totalorder %s21, 1
      %p133 = por %p131, %p132
      %p135 = scmp.ne.s32.totalorder %s118, %s134
      %p136 = scmp.eq.s32.totalorder %s21, 0
      %p137 = por %p135, %p136
      %p138 = scmp.le.s32.totalorder 1, %s15
      %p139 = scmp.lt.s32.totalorder %s15, 3
      %p140 = pnand %p138, %p139
      %p141 = pneg %p140
      // Predicated region
      $region9: #{neural_net_forward.1} parent=5 // pred_check
        _
      $region10: #{neural_net_forward.1} parent=5 // pred_check_branch
        %143 = sbr.rel (%p140) target = $region12
      $region11: #{neural_net_forward.1} parent=5 // pred_region
        %s144 = ssub.s32 %s15, 1
        // Predicated region
        $region13: #{neural_net_forward.1} parent=11 // pred_check
          %p145 = pneg %p62
        $region14: #{neural_net_forward.1} parent=11 // pred_check_branch
          %147 = sbr.rel (%p145) target = $region16
        $region15: #{neural_net_forward.1} parent=11 // pred_region
          %s149 = ssub.s32 256, 256
          %150 = vsyncadd [#allocation5], %s149
          %s151 = sshll.u32 [#allocation4], 4
          %s152 = int_to_ptr.vmem [resolvable:$true] %s151
          %157 = dma.hbm_to_vmem [thread:$0]  %s1, 256, %s152, [#allocation5], 64, 64, 4
        $region16: #{neural_net_forward.1} parent=11 // pred_fallthru
          _
        // Predicated region
        $region17: #{neural_net_forward.1} parent=11 // pred_check
          %p158 = pneg %p83
        $region18: #{neural_net_forward.1} parent=11 // pred_check_branch
          %160 = sbr.rel (%p158) target = $region20
        $region19: #{neural_net_forward.1} parent=11 // pred_region
          %s162 = ssub.s32 3072, 3072
          %163 = vsyncadd [#allocation5], %s162
          %s164 = sshll.u32 [#allocation6], 4
          %s165 = int_to_ptr.vmem [resolvable:$true] %s164
          %170 = dma.hbm_to_vmem [thread:$0]  %s2, 3072, %s165, [#allocation5], 64, 64, 4
        $region20: #{neural_net_forward.1} parent=11 // pred_fallthru
          _
        // Predicated region
        $region21: #{neural_net_forward.1} parent=11 // pred_check
          %p171 = pneg %p104
        $region22: #{neural_net_forward.1} parent=11 // pred_check_branch
          %173 = sbr.rel (%p171) target = $region24
        $region23: #{neural_net_forward.1} parent=11 // pred_region
          %s175 = ssub.s32 128, 128
          %176 = vsyncadd [#allocation8], %s175
          %s178 = sshll.u32 [#allocation7], 4
          %s179 = int_to_ptr.vmem [resolvable:$true] %s178
          %181 = dma.hbm_to_vmem [thread:$0]  %s3, 128, %s179, [#allocation8]
        $region24: #{neural_net_forward.1} parent=11 // pred_fallthru
          _
      $region12: #{neural_net_forward.1} parent=5 // pred_fallthru
        _
      %p182 = scmp.lt.s32.totalorder %s15, 2
      // Predicated region
      $region25: #{neural_net_forward.1} parent=5 // pred_check
        %p183 = pneg %p182
      $region26: #{neural_net_forward.1} parent=5 // pred_check_branch
        %185 = sbr.rel (%p183) target = $region28
      $region27: #{neural_net_forward.1} parent=5 // pred_region
        // Predicated region
        $region29: #{neural_net_forward.1} parent=27 // pred_check
          %p186 = pneg %p35
        $region30: #{neural_net_forward.1} parent=27 // pred_check_branch
          %188 = sbr.rel (%p186) target = $region32
        $region31: #{neural_net_forward.1} parent=27 // pred_region
          %s189 = sand.u32 %s25, 1
          %s190 = scalar_lea.sflag [#allocation3], %s189
          %s191 = sand.u32 %s25, 1
          %s192 = smul.addr %s191, 8
          %s193 = scalar_lea.vmem [#allocation2], %s192
          %s195 = ssub.s32 128, 128
          %196 = vsyncadd %s190, %s195
          %s197 = smul.addr %s15, 128
          %s198 = scalar_lea.hbm %s0, %s197
          %s200 = sshll.u32 %s193, 4
          %s201 = int_to_ptr.vmem [resolvable:$true] %s200
          %203 = dma.hbm_to_vmem [thread:$0]  %s198, 128, %s201, %s190
        $region32: #{neural_net_forward.1} parent=27 // pred_fallthru
          _
      $region28: #{neural_net_forward.1} parent=5 // pred_fallthru
        _
      %p204 = scmp.le.s32.totalorder 1, %s15
      %p205 = scmp.lt.s32.totalorder %s15, 3
      %p206 = pnand %p204, %p205
      %p207 = pneg %p206
      // Predicated region
      $region33: #{neural_net_forward.1} parent=5 // pred_check
        _
      $region34: #{neural_net_forward.1} parent=5 // pred_check_branch
        %209 = sbr.rel (%p206) target = $region36
      $region35: #{neural_net_forward.1} parent=5 // pred_region
        %s210 = ssub.s32 %s15, 1
        %s211 = sand.u32 %s28, 1
        %s212 = scalar_lea.sflag [#allocation3], %s211
        %s213 = sand.u32 %s28, 1
        %s214 = smul.addr %s213, 8
        %s215 = scalar_lea.vmem [#allocation2], %s214
        // Predicated region
        $region37: #{neural_net_forward.1} parent=35 // pred_check
          %p216 = pneg %p41
        $region38: #{neural_net_forward.1} parent=35 // pred_check_branch
          %218 = sbr.rel (%p216) target = $region40
        $region39: #{neural_net_forward.1} parent=35 // pred_region
          %219 = dma.done %s212, 128
        $region40: #{neural_net_forward.1} parent=35 // pred_fallthru
          _
        // Predicated region
        $region41: #{neural_net_forward.1} parent=35 // pred_check
          %p220 = pneg %p62
        $region42: #{neural_net_forward.1} parent=35 // pred_check_branch
          %222 = sbr.rel (%p220) target = $region44
        $region43: #{neural_net_forward.1} parent=35 // pred_region
          %223 = dma.done [#allocation5], 256
        $region44: #{neural_net_forward.1} parent=35 // pred_fallthru
          _
        // Predicated region
        $region45: #{neural_net_forward.1} parent=35 // pred_check
          %p224 = pneg %p83
        $region46: #{neural_net_forward.1} parent=35 // pred_check_branch
          %226 = sbr.rel (%p224) target = $region48
        $region47: #{neural_net_forward.1} parent=35 // pred_region
          %227 = dma.done [#allocation5], 3072
        $region48: #{neural_net_forward.1} parent=35 // pred_fallthru
          _
        // Predicated region
        $region49: #{neural_net_forward.1} parent=35 // pred_check
          %p228 = pneg %p104
        $region50: #{neural_net_forward.1} parent=35 // pred_check_branch
          %230 = sbr.rel (%p228) target = $region52
        $region51: #{neural_net_forward.1} parent=35 // pred_region
          %231 = dma.done [#allocation8], 128
        $region52: #{neural_net_forward.1} parent=35 // pred_fallthru
          _
        %s232 = sand.u32 %s28, 1
        %s233 = scalar_lea.sflag [#allocation3], %s232
        %s234 = sand.u32 %s28, 1
        %s235 = smul.addr %s234, 8
        %s236 = scalar_lea.vmem [#allocation2], %s235
        %p237 = pneg %p41
        %p238 = pneg %p38
        %p239 = pneg %p62
        %p240 = pneg %p59
        %p241 = pneg %p83
        %p242 = pneg %p80
        %p243 = pneg %p104
        %p244 = pneg %p101
        %p245 = pneg %p130
        %p246 = pneg %p127
        %p247 = scmp.lt.s32.totalorder %s20, 1
        %s248 = scalar_select %p247, %s20, 1
        %s249 = smul.addr %s248, 8
        %s250 = scalar_lea.vmem %s4, %s249
        %p251 = scmp.lt.s32.totalorder %s20, 1
        %s252 = scalar_select %p251, %s20, 1
        %s253 = smul.addr %s252, 8
        %s254 = scalar_lea.vmem %s4, %s253
        %v256 = vld [vmem:[%s215] sm:$0xff]
        %v257 = vpack.c.bf16 %v256, %v256
        %v258 = vld [vmem:[#allocation7] sm:$0xff]
        %v259 = vld [vmem:[#allocation4] sm:$0xf]
        %v260 = vld [vmem:[#allocation4 + $0x4] sm:$0xf]
        %v261 = vld [vmem:[#allocation4 + $0x8] sm:$0xf]
        %v262 = vld [vmem:[#allocation4 + $0xc] sm:$0xf]
        %v263 = vlaneseq
        %v264 = vshrl.u32 %v263, 7
        %v265 = vsub.s32 0, %v264
        %v266 = vrot.slane %v258, %v265
        %v271 = vunpack.c.l.b16 %v259
        %v272 = vunpack.c.l.b16 %v260
        %v273 = vunpack.c.l.b16 %v261
        %v274 = vunpack.c.l.b16 %v262
        %v275 = vpack.c.b16 %v272, %v271
        %v276 = vpack.c.b16 %v274, %v273
        %vm279 = vcmask 261120
        %v281 = vsel %vm279, %v257, 0
        %283 = vmatprep.subr.bf16.mxu0 0
        %284 = vmatpush1.bf16.msra.mxu0 0
        %285 = vmatprep.subr.bf16.mxu0 0
        %286 = vmatpush1.bf16.msra.mxu0 0
        %287 = vmatprep.subr.bf16.mxu0 0
        %288 = vmatpush1.bf16.msra.mxu0 0
        %289 = vmatprep.subr.bf16.mxu0 0
        %290 = vmatpush1.bf16.msra.mxu0 0
        %291 = vmatprep.subr.bf16.mxu0 0
        %292 = vmatpush1.bf16.msra.mxu0 0
        %293 = vmatprep.subr.bf16.mxu0 0
        %294 = vmatpush1.bf16.msra.mxu0 0
        %295 = vmatprep.subr.bf16.mxu0 0
        %296 = vmatpush1.bf16.msra.mxu0 %v276
        %297 = vmatprep.subr.bf16.mxu0 0
        %298 = vmatpush1.bf16.msra.mxu0 %v275
        %299 = vmatprep.subr.bf16.mxu0 0
        %300 = vmatpush2.bf16.msra.mxu0 0
        %301 = vmatprep.subr.bf16.mxu0 0
        %302 = vmatpush2.bf16.msra.mxu0 0
        %303 = vmatprep.subr.bf16.mxu0 0
        %304 = vmatpush2.bf16.msra.mxu0 0
        %305 = vmatprep.subr.bf16.mxu0 0
        %306 = vmatpush2.bf16.msra.mxu0 0
        %307 = vmatprep.subr.bf16.mxu0 0
        %308 = vmatpush2.bf16.msra.mxu0 0
        %309 = vmatprep.subr.bf16.mxu0 0
        %310 = vmatpush2.bf16.msra.mxu0 0
        %311 = vmatprep.subr.bf16.mxu0 0
        %312 = vmatpush2.bf16.msra.mxu0 0
        %313 = vmatprep.subr.bf16.mxu0 0
        %314 = vmatpush2.bf16.msra.mxu0 0
        %315 = vmatprep.mubr.bf16.mxu0 0
        %316 = vmatmul.mubr.bf16.gmra.mxu0 %v281
        %v317 = vpop.f32.mrf.mxu0
        %v318 = vadd.f32 %v266, %v317
        %v319 = vpop.f32.mrf.mxu0
        %v320 = vpop.f32.mrf.mxu0
        %v321 = vpop.f32.mrf.mxu0
        %322 = vdwg.mxu0
        %v323 = vmax.f32 %v318, 0.0
        %v324 = vpack.c.bf16 %v323, %v323
        %v325 = vld [vmem:[#allocation6] sm:$0xf]
        %v326 = vld [vmem:[#allocation6 + $0x4] sm:$0xf]
        %v327 = vld [vmem:[#allocation6 + $0x8] sm:$0xf]
        %v328 = vld [vmem:[#allocation6 + $0xc] sm:$0xf]
        %v329 = vld [vmem:[#allocation6 + $0x10] sm:$0xf]
        %v330 = vld [vmem:[#allocation6 + $0x14] sm:$0xf]
        %v331 = vld [vmem:[#allocation6 + $0x18] sm:$0xf]
        %v332 = vld [vmem:[#allocation6 + $0x1c] sm:$0xf]
        %v333 = vld [vmem:[#allocation6 + $0x20] sm:$0xf]
        %v334 = vld [vmem:[#allocation6 + $0x24] sm:$0xf]
        %v335 = vld [vmem:[#allocation6 + $0x28] sm:$0xf]
        %v336 = vld [vmem:[#allocation6 + $0x2c] sm:$0xf]
        %v337 = vld [vmem:[#allocation6 + $0x30] sm:$0xf]
        %v338 = vld [vmem:[#allocation6 + $0x34] sm:$0xf]
        %v339 = vld [vmem:[#allocation6 + $0x38] sm:$0xf]
        %v340 = vld [vmem:[#allocation6 + $0x3c] sm:$0xf]
        %v341 = vlaneseq
        %v342 = vshrl.u32 %v341, 7
        %v343 = vsub.s32 1, %v342
        %v344 = vrot.slane %v258, %v343
        %v361 = vunpack.c.l.b16 %v325
        %v362 = vunpack.c.l.b16 %v326
        %v363 = vunpack.c.l.b16 %v327
        %v364 = vunpack.c.l.b16 %v328
        %v365 = vunpack.c.l.b16 %v329
        %v366 = vunpack.c.l.b16 %v330
        %v367 = vunpack.c.l.b16 %v331
        %v368 = vunpack.c.l.b16 %v332
        %v369 = vunpack.c.l.b16 %v333
        %v370 = vunpack.c.l.b16 %v334
        %v371 = vunpack.c.l.b16 %v335
        %v372 = vunpack.c.l.b16 %v336
        %v373 = vunpack.c.l.b16 %v337
        %v374 = vunpack.c.l.b16 %v338
        %v375 = vunpack.c.l.b16 %v339
        %v376 = vunpack.c.l.b16 %v340
        %v377 = vpack.c.b16 %v362, %v361
        %v378 = vpack.c.b16 %v364, %v363
        %v379 = vpack.c.b16 %v366, %v365
        %v380 = vpack.c.b16 %v368, %v367
        %v381 = vpack.c.b16 %v370, %v369
        %v382 = vpack.c.b16 %v372, %v371
        %v383 = vpack.c.b16 %v374, %v373
        %v384 = vpack.c.b16 %v376, %v375
        %393 = vmatprep.subr.bf16.mxu0 0
        %394 = vmatpush1.bf16.msra.mxu0 %v384
        %395 = vmatprep.subr.bf16.mxu0 0
        %396 = vmatpush1.bf16.msra.mxu0 %v383
        %397 = vmatprep.subr.bf16.mxu0 0
        %398 = vmatpush1.bf16.msra.mxu0 %v382
        %399 = vmatprep.subr.bf16.mxu0 0
        %400 = vmatpush1.bf16.msra.mxu0 %v381
        %401 = vmatprep.subr.bf16.mxu0 0
        %402 = vmatpush1.bf16.msra.mxu0 %v380
        %403 = vmatprep.subr.bf16.mxu0 0
        %404 = vmatpush1.bf16.msra.mxu0 %v379
        %405 = vmatprep.subr.bf16.mxu0 0
        %406 = vmatpush1.bf16.msra.mxu0 %v378
        %407 = vmatprep.subr.bf16.mxu0 0
        %408 = vmatpush1.bf16.msra.mxu0 %v377
        %409 = vmatprep.subr.bf16.mxu0 0
        %410 = vmatpush2.bf16.msra.mxu0 0
        %411 = vmatprep.subr.bf16.mxu0 0
        %412 = vmatpush2.bf16.msra.mxu0 0
        %413 = vmatprep.subr.bf16.mxu0 0
        %414 = vmatpush2.bf16.msra.mxu0 0
        %415 = vmatprep.subr.bf16.mxu0 0
        %416 = vmatpush2.bf16.msra.mxu0 0
        %417 = vmatprep.subr.bf16.mxu0 0
        %418 = vmatpush2.bf16.msra.mxu0 0
        %419 = vmatprep.subr.bf16.mxu0 0
        %420 = vmatpush2.bf16.msra.mxu0 0
        %421 = vmatprep.subr.bf16.mxu0 0
        %422 = vmatpush2.bf16.msra.mxu0 0
        %423 = vmatprep.subr.bf16.mxu0 0
        %424 = vmatpush2.bf16.msra.mxu0 0
        %425 = vmatprep.mubr.bf16.mxu0 0
        %426 = vmatmul.mubr.bf16.gmra.mxu0 %v324
        %v427 = vpop.f32.mrf.mxu0
        %v428 = vadd.f32 %v344, %v427
        %v429 = vpop.f32.mrf.mxu0
        %v430 = vpop.f32.mrf.mxu0
        %v431 = vpop.f32.mrf.mxu0
        %432 = vdwg.mxu0
        %v433 = vmax.f32 %v428, 0.0
        %v434 = vpack.c.bf16 %v433, %v433
        %s435 = scalar_lea.vmem [#allocation6], 64
        %v436 = vld [vmem:[%s435] sm:$0xf]
        %v437 = vld [vmem:[%s435 + $0x4] sm:$0xf]
        %v438 = vld [vmem:[%s435 + $0x8] sm:$0xf]
        %v439 = vld [vmem:[%s435 + $0xc] sm:$0xf]
        %v440 = vld [vmem:[%s435 + $0x10] sm:$0xf]
        %v441 = vld [vmem:[%s435 + $0x14] sm:$0xf]
        %v442 = vld [vmem:[%s435 + $0x18] sm:$0xf]
        %v443 = vld [vmem:[%s435 + $0x1c] sm:$0xf]
        %v444 = vld [vmem:[%s435 + $0x20] sm:$0xf]
        %v445 = vld [vmem:[%s435 + $0x24] sm:$0xf]
        %v446 = vld [vmem:[%s435 + $0x28] sm:$0xf]
        %v447 = vld [vmem:[%s435 + $0x2c] sm:$0xf]
        %v448 = vld [vmem:[%s435 + $0x30] sm:$0xf]
        %v449 = vld [vmem:[%s435 + $0x34] sm:$0xf]
        %v450 = vld [vmem:[%s435 + $0x38] sm:$0xf]
        %v451 = vld [vmem:[%s435 + $0x3c] sm:$0xf]
        %v452 = vlaneseq
        %v453 = vshrl.u32 %v452, 7
        %v454 = vsub.s32 2, %v453
        %v455 = vrot.slane %v258, %v454
        %v472 = vunpack.c.l.b16 %v436
        %v473 = vunpack.c.l.b16 %v437
        %v474 = vunpack.c.l.b16 %v438
        %v475 = vunpack.c.l.b16 %v439
        %v476 = vunpack.c.l.b16 %v440
        %v477 = vunpack.c.l.b16 %v441
        %v478 = vunpack.c.l.b16 %v442
        %v479 = vunpack.c.l.b16 %v443
        %v480 = vunpack.c.l.b16 %v444
        %v481 = vunpack.c.l.b16 %v445
        %v482 = vunpack.c.l.b16 %v446
        %v483 = vunpack.c.l.b16 %v447
        %v484 = vunpack.c.l.b16 %v448
        %v485 = vunpack.c.l.b16 %v449
        %v486 = vunpack.c.l.b16 %v450
        %v487 = vunpack.c.l.b16 %v451
        %v488 = vpack.c.b16 %v473, %v472
        %v489 = vpack.c.b16 %v475, %v474
        %v490 = vpack.c.b16 %v477, %v476
        %v491 = vpack.c.b16 %v479, %v478
        %v492 = vpack.c.b16 %v481, %v480
        %v493 = vpack.c.b16 %v483, %v482
        %v494 = vpack.c.b16 %v485, %v484
        %v495 = vpack.c.b16 %v487, %v486
        %504 = vmatprep.subr.bf16.mxu0 0
        %505 = vmatpush1.bf16.msra.mxu0 %v495
        %506 = vmatprep.subr.bf16.mxu0 0
        %507 = vmatpush1.bf16.msra.mxu0 %v494
        %508 = vmatprep.subr.bf16.mxu0 0
        %509 = vmatpush1.bf16.msra.mxu0 %v493
        %510 = vmatprep.subr.bf16.mxu0 0
        %511 = vmatpush1.bf16.msra.mxu0 %v492
        %512 = vmatprep.subr.bf16.mxu0 0
        %513 = vmatpush1.bf16.msra.mxu0 %v491
        %514 = vmatprep.subr.bf16.mxu0 0
        %515 = vmatpush1.bf16.msra.mxu0 %v490
        %516 = vmatprep.subr.bf16.mxu0 0
        %517 = vmatpush1.bf16.msra.mxu0 %v489
        %518 = vmatprep.subr.bf16.mxu0 0
        %519 = vmatpush1.bf16.msra.mxu0 %v488
        %520 = vmatprep.subr.bf16.mxu0 0
        %521 = vmatpush2.bf16.msra.mxu0 0
        %522 = vmatprep.subr.bf16.mxu0 0
        %523 = vmatpush2.bf16.msra.mxu0 0
        %524 = vmatprep.subr.bf16.mxu0 0
        %525 = vmatpush2.bf16.msra.mxu0 0
        %526 = vmatprep.subr.bf16.mxu0 0
        %527 = vmatpush2.bf16.msra.mxu0 0
        %528 = vmatprep.subr.bf16.mxu0 0
        %529 = vmatpush2.bf16.msra.mxu0 0
        %530 = vmatprep.subr.bf16.mxu0 0
        %531 = vmatpush2.bf16.msra.mxu0 0
        %532 = vmatprep.subr.bf16.mxu0 0
        %533 = vmatpush2.bf16.msra.mxu0 0
        %534 = vmatprep.subr.bf16.mxu0 0
        %535 = vmatpush2.bf16.msra.mxu0 0
        %536 = vmatprep.mubr.bf16.mxu0 0
        %537 = vmatmul.mubr.bf16.gmra.mxu0 %v434
        %v538 = vpop.f32.mrf.mxu0
        %v539 = vadd.f32 %v455, %v538
        %v540 = vpop.f32.mrf.mxu0
        %v541 = vpop.f32.mrf.mxu0
        %v542 = vpop.f32.mrf.mxu0
        %543 = vdwg.mxu0
        %v544 = vmax.f32 %v539, 0.0
        %v545 = vpack.c.bf16 %v544, %v544
        %s546 = scalar_lea.vmem [#allocation6], 128
        %v547 = vld [vmem:[%s546] sm:$0xf]
        %v548 = vld [vmem:[%s546 + $0x4] sm:$0xf]
        %v549 = vld [vmem:[%s546 + $0x8] sm:$0xf]
        %v550 = vld [vmem:[%s546 + $0xc] sm:$0xf]
        %v551 = vld [vmem:[%s546 + $0x10] sm:$0xf]
        %v552 = vld [vmem:[%s546 + $0x14] sm:$0xf]
        %v553 = vld [vmem:[%s546 + $0x18] sm:$0xf]
        %v554 = vld [vmem:[%s546 + $0x1c] sm:$0xf]
        %v555 = vld [vmem:[%s546 + $0x20] sm:$0xf]
        %v556 = vld [vmem:[%s546 + $0x24] sm:$0xf]
        %v557 = vld [vmem:[%s546 + $0x28] sm:$0xf]
        %v558 = vld [vmem:[%s546 + $0x2c] sm:$0xf]
        %v559 = vld [vmem:[%s546 + $0x30] sm:$0xf]
        %v560 = vld [vmem:[%s546 + $0x34] sm:$0xf]
        %v561 = vld [vmem:[%s546 + $0x38] sm:$0xf]
        %v562 = vld [vmem:[%s546 + $0x3c] sm:$0xf]
        %v563 = vlaneseq
        %v564 = vshrl.u32 %v563, 7
        %v565 = vsub.s32 3, %v564
        %v566 = vrot.slane %v258, %v565
        %v583 = vunpack.c.l.b16 %v547
        %v584 = vunpack.c.l.b16 %v548
        %v585 = vunpack.c.l.b16 %v549
        %v586 = vunpack.c.l.b16 %v550
        %v587 = vunpack.c.l.b16 %v551
        %v588 = vunpack.c.l.b16 %v552
        %v589 = vunpack.c.l.b16 %v553
        %v590 = vunpack.c.l.b16 %v554
        %v591 = vunpack.c.l.b16 %v555
        %v592 = vunpack.c.l.b16 %v556
        %v593 = vunpack.c.l.b16 %v557
        %v594 = vunpack.c.l.b16 %v558
        %v595 = vunpack.c.l.b16 %v559
        %v596 = vunpack.c.l.b16 %v560
        %v597 = vunpack.c.l.b16 %v561
        %v598 = vunpack.c.l.b16 %v562
        %v599 = vpack.c.b16 %v584, %v583
        %v600 = vpack.c.b16 %v586, %v585
        %v601 = vpack.c.b16 %v588, %v587
        %v602 = vpack.c.b16 %v590, %v589
        %v603 = vpack.c.b16 %v592, %v591
        %v604 = vpack.c.b16 %v594, %v593
        %v605 = vpack.c.b16 %v596, %v595
        %v606 = vpack.c.b16 %v598, %v597
        %615 = vmatprep.subr.bf16.mxu0 0
        %616 = vmatpush1.bf16.msra.mxu0 %v606
        %617 = vmatprep.subr.bf16.mxu0 0
        %618 = vmatpush1.bf16.msra.mxu0 %v605
        %619 = vmatprep.subr.bf16.mxu0 0
        %620 = vmatpush1.bf16.msra.mxu0 %v604
        %621 = vmatprep.subr.bf16.mxu0 0
        %622 = vmatpush1.bf16.msra.mxu0 %v603
        %623 = vmatprep.subr.bf16.mxu0 0
        %624 = vmatpush1.bf16.msra.mxu0 %v602
        %625 = vmatprep.subr.bf16.mxu0 0
        %626 = vmatpush1.bf16.msra.mxu0 %v601
        %627 = vmatprep.subr.bf16.mxu0 0
        %628 = vmatpush1.bf16.msra.mxu0 %v600
        %629 = vmatprep.subr.bf16.mxu0 0
        %630 = vmatpush1.bf16.msra.mxu0 %v599
        %631 = vmatprep.subr.bf16.mxu0 0
        %632 = vmatpush2.bf16.msra.mxu0 0
        %633 = vmatprep.subr.bf16.mxu0 0
        %634 = vmatpush2.bf16.msra.mxu0 0
        %635 = vmatprep.subr.bf16.mxu0 0
        %636 = vmatpush2.bf16.msra.mxu0 0
        %637 = vmatprep.subr.bf16.mxu0 0
        %638 = vmatpush2.bf16.msra.mxu0 0
        %639 = vmatprep.subr.bf16.mxu0 0
        %640 = vmatpush2.bf16.msra.mxu0 0
        %641 = vmatprep.subr.bf16.mxu0 0
        %642 = vmatpush2.bf16.msra.mxu0 0
        %643 = vmatprep.subr.bf16.mxu0 0
        %644 = vmatpush2.bf16.msra.mxu0 0
        %645 = vmatprep.subr.bf16.mxu0 0
        %646 = vmatpush2.bf16.msra.mxu0 0
        %647 = vmatprep.mubr.bf16.mxu0 0
        %648 = vmatmul.mubr.bf16.gmra.mxu0 %v545
        %v649 = vpop.f32.mrf.mxu0
        %v650 = vadd.f32 %v566, %v649
        %v651 = vpop.f32.mrf.mxu0
        %v652 = vpop.f32.mrf.mxu0
        %v653 = vpop.f32.mrf.mxu0
        %654 = vdwg.mxu0
        %655 = vmax.xlane.f32.xlu0 %v650
        %v656 = vpop.xlane.xlu0 %655
        %v657 = vsub.f32 %v650, %v656
        %v658 = vmul.f32 %v657, 1.442695
        %v659 = vpow.pop %v658
        %660 = vadd.xlane.f32.xlu0 %v659
        %v661 = vpop.xlane.xlu0 %660
        %v662 = vrcp.pop %v661
        %v663 = vmul.f32 %v659, %v662
        %vm664 = vcmask 48128
        %665 = vst.msk [vmem:[%s254] sm:$0xff] %vm664, %v663
        %p666 = scmp.lt.s32.totalorder %s20, 1
        %s667 = scalar_select %p666, %s20, 1
        %s668 = smul.addr %s667, 8
        %s669 = scalar_lea.vmem %s4, %s668
        // Predicated region
        $region53: #{neural_net_forward.1} parent=35 // pred_check
          %p670 = pneg %p127
        $region54: #{neural_net_forward.1} parent=35 // pred_check_branch
          %672 = sbr.rel (%p670) target = $region56
        $region55: #{neural_net_forward.1} parent=35 // pred_region
          _
        $region56: #{neural_net_forward.1} parent=35 // pred_fallthru
          _
      $region36: #{neural_net_forward.1} parent=5 // pred_fallthru
        _
      %p673 = scmp.le.s32.totalorder 2, %s15
      // Predicated region
      $region57: #{neural_net_forward.1} parent=5 // pred_check
        %p674 = pneg %p673
      $region58: #{neural_net_forward.1} parent=5 // pred_check_branch
        %676 = sbr.rel (%p674) target = $region60
      $region59: #{neural_net_forward.1} parent=5 // pred_region
        %s677 = ssub.s32 %s15, 2
        // Predicated region
        $region61: #{neural_net_forward.1} parent=59 // pred_check
          %p678 = pneg %p133
        $region62: #{neural_net_forward.1} parent=59 // pred_check_branch
          %680 = sbr.rel (%p678) target = $region64
        $region63: #{neural_net_forward.1} parent=59 // pred_region
          %p681 = scmp.lt.s32.totalorder %s21, 1
          %s682 = scalar_select %p681, %s21, 1
          %s683 = smul.addr %s682, 8
          %s684 = scalar_lea.vmem %s4, %s683
        $region64: #{neural_net_forward.1} parent=59 // pred_fallthru
          _
      $region60: #{neural_net_forward.1} parent=5 // pred_fallthru
        _
    $region6: #{neural_net_forward.1} parent=1 // loop_footer
      %s19 = sadd.s32 1, %s15
    $region7: #{neural_net_forward.1} parent=1 // loop_footer_branch
      %14 = sbr.rel target = $region3
    $region8: #{neural_net_forward.1} parent=1 // loop_exit
      _
    %685 = vsyncpa [#allocation3], 1
    %s686 = scalar_lea.sflag [#allocation3], 1
    %687 = vsyncpa %s686, 1
    %688 = vsyncpa [#allocation5], 1
    %689 = vsyncpa [#allocation8], 1

</llo_original>
